<compile_context>
chip_gen: v7x
topology: tpu7x:2x2x1
jax: 0.10.0
libtpu: 0.0.40
codegen_flags: <defaults>
</compile_context>

<pallas_src>
import functools

import jax
import jax.numpy as jnp
from jax.experimental import pallas as pl
from jax.experimental.pallas import tpu as pltpu


_NEG_INF = -1e30  # finite "minus infinity": avoids inf-inf NaNs in the online lse


def _round_up(x, m):
    return (x + m - 1) // m * m


def _select_tile_and_vmem(bp, ep, hp, v):
    """Pick the vocab tile width TN and a generation-safe VMEM limit."""
    f32, bf16 = 4, 2
    resident = (bp * ep * f32            # x
                + bp * hp * f32          # h_prev
                + ep * 3 * hp * bf16     # W_ih
                + hp * 3 * hp * bf16     # W_hh
                + 2 * 3 * hp * f32       # biases
                + 2 * bp * hp * f32      # h_new output + h scratch
                + 3 * bp * 128 * f32)    # lse output + m/l scratch (lane-padded)
    budget = 24 << 20                    # keep well under v7x's 64 MiB physical VMEM
    v_cap = _round_up(v, 128)
    tn = 128
    for cand in (2048, 1024, 512, 256, 128):
        if cand > v_cap:
            continue
        per_tile = 2 * (hp * cand * bf16 + cand * f32 + bp * cand * f32)  # dbl-buffered
        if resident + per_tile <= budget:
            tn = cand
            break
    per_tile = 2 * (hp * tn * bf16 + tn * f32 + bp * tn * f32)
    est = resident + per_tile
    vmem_limit = int(min(max(2 * est, 16 << 20), 48 << 20))
    return tn, vmem_limit


def _decoder_kernel(x_ref, h_ref, wih_ref, whh_ref, bih_ref, bhh_ref,
                    wout_ref, bout_ref,
                    logits_ref, hnew_ref, lse_ref,
                    h_sc, m_sc, l_sc, *, hp):
    j = pl.program_id(0)

    @pl.when(j == 0)
    def _gru_cell():
        # ReLU(embedding(x)) in f32, bf16 operands for the MXU, f32 accumulation.
        x = jnp.maximum(x_ref[...], 0.0)
        h = h_ref[...]
        gi = jnp.dot(x.astype(jnp.bfloat16), wih_ref[...],
                     preferred_element_type=jnp.float32) + bih_ref[...]
        gh = jnp.dot(h.astype(jnp.bfloat16), whh_ref[...],
                     preferred_element_type=jnp.float32) + bhh_ref[...]
        # Gate blocks are each `hp` wide with hp % 128 == 0 -> lane-aligned slices.
        i_r, i_z, i_n = gi[:, 0:hp], gi[:, hp:2 * hp], gi[:, 2 * hp:3 * hp]
        h_r, h_z, h_n = gh[:, 0:hp], gh[:, hp:2 * hp], gh[:, 2 * hp:3 * hp]
        r = jax.nn.sigmoid(i_r + h_r)
        z = jax.nn.sigmoid(i_z + h_z)
        n = jnp.tanh(i_n + r * h_n)
        h_sc[...] = (1.0 - z) * n + z * h
        m_sc[...] = jnp.full_like(m_sc, _NEG_INF)
        l_sc[...] = jnp.zeros_like(l_sc)

    # Output projection for this vocab tile (W_out streams tile-by-tile through VMEM).
    h_bf = h_sc[...].astype(jnp.bfloat16)
    logits = jnp.dot(h_bf, wout_ref[...],
                     preferred_element_type=jnp.float32) + bout_ref[...]
    logits_ref[...] = logits

    # Online (flash-style) logsumexp across vocab tiles.
    m_prev = m_sc[...]
    m_new = jnp.maximum(m_prev, jnp.max(logits, axis=-1, keepdims=True))
    l_sc[...] = (l_sc[...] * jnp.exp(m_prev - m_new)
                 + jnp.sum(jnp.exp(logits - m_new), axis=-1, keepdims=True))
    m_sc[...] = m_new

    @pl.when(j == pl.num_programs(0) - 1)
    def _finalize():
        hnew_ref[...] = h_sc[...]
        lse_ref[...] = m_sc[...] + jnp.log(l_sc[...])


def prepare_params(params, batch_size):
    """One-time repack: pad to TPU tile sizes, cast matmul operands to bf16."""
    emb = params["embedding"]
    V, E = emb.shape
    H = params["w_hh"].shape[0]

    Bp = _round_up(max(batch_size, 1), 8)
    Ep = _round_up(E, 128)
    Hp = _round_up(H, 128)
    TN, vmem_limit = _select_tile_and_vmem(Bp, Ep, Hp, V)
    Vp = _round_up(V, TN)

    def pad_gated(w, rows_p):  # (rows, 3H) r|z|n -> (rows_p, 3*Hp)
        rows = w.shape[0]
        gates = [jnp.pad(w[:, g * H:(g + 1) * H],
                         ((0, rows_p - rows), (0, Hp - H))) for g in range(3)]
        return jnp.concatenate(gates, axis=1)

    arrays = {
        "embedding": jnp.pad(emb, ((0, 0), (0, Ep - E))).astype(jnp.float32),
        "w_ih": pad_gated(params["w_ih"], Ep).astype(jnp.bfloat16),
        "w_hh": pad_gated(params["w_hh"], Hp).astype(jnp.bfloat16),
        "b_ih": pad_gated(params["b_ih"], 1).astype(jnp.float32),
        "b_hh": pad_gated(params["b_hh"], 1).astype(jnp.float32),
        "w_out": jnp.pad(params["w_out"],
                         ((0, Hp - H), (0, Vp - V))).astype(jnp.bfloat16),
        # padded vocab columns get -1e30 so they vanish from the logsumexp
        "b_out": jnp.pad(params["b_out"], ((0, 0), (0, Vp - V)),
                         constant_values=_NEG_INF).astype(jnp.float32),
    }
    meta = dict(B=batch_size, V=V, E=E, H=H, Bp=Bp, Vp=Vp, Ep=Ep, Hp=Hp,
                TN=TN, vmem_limit_bytes=vmem_limit)
    return {"arrays": arrays, "meta": meta}


def decoder_forward(inputs, hidden, prepared):
    """inputs: (B,) int32 token ids; hidden: (1, B, H) float32."""
    a, m = prepared["arrays"], prepared["meta"]
    B, V, H = m["B"], m["V"], m["H"]
    Bp, Vp, Ep, Hp, TN = m["Bp"], m["Vp"], m["Ep"], m["Hp"], m["TN"]

    # Glue: embedding gather (== embedding(inputs).view(-1, 1, E) for one decode step).
    # TODO(synk): fold the gather into the kernel via PrefetchScalarGridSpec +
    # pl.Element row-gather to avoid materializing x_emb in HBM.
    x = jnp.take(a["embedding"], inputs, axis=0)                    # (B, Ep) f32
    x = jnp.pad(x, ((0, Bp - B), (0, 0)))
    h = jnp.pad(hidden.reshape(B, H).astype(jnp.float32),
                ((0, Bp - B), (0, Hp - H)))

    kernel = functools.partial(_decoder_kernel, hp=Hp)

    logits, h_new, lse = pl.pallas_call(
        kernel,
        out_shape=(
            jax.ShapeDtypeStruct((Bp, Vp), jnp.float32),   # raw logits
            jax.ShapeDtypeStruct((Bp, Hp), jnp.float32),   # new hidden
            jax.ShapeDtypeStruct((Bp, 1), jnp.float32),    # logsumexp per row
        ),
        grid_spec=pltpu.PrefetchScalarGridSpec(
            num_scalar_prefetch=0,
            grid=(Vp // TN,),
            in_specs=[
                pl.BlockSpec((Bp, Ep), lambda j: (0, 0)),       # x        (resident)
                pl.BlockSpec((Bp, Hp), lambda j: (0, 0)),       # h_prev   (resident)
                pl.BlockSpec((Ep, 3 * Hp), lambda j: (0, 0)),   # W_ih     (resident, bf16)
                pl.BlockSpec((Hp, 3 * Hp), lambda j: (0, 0)),   # W_hh     (resident, bf16)
                pl.BlockSpec((1, 3 * Hp), lambda j: (0, 0)),    # b_ih
                pl.BlockSpec((1, 3 * Hp), lambda j: (0, 0)),    # b_hh
                pl.BlockSpec((Hp, TN), lambda j: (0, j)),       # W_out tile (streamed)
                pl.BlockSpec((1, TN), lambda j: (0, j)),        # b_out tile
            ],
            out_specs=(
                pl.BlockSpec((Bp, TN), lambda j: (0, j)),       # logits tile
                pl.BlockSpec((Bp, Hp), lambda j: (0, 0)),       # h_new
                pl.BlockSpec((Bp, 1), lambda j: (0, 0)),        # lse
            ),
            scratch_shapes=[
                pltpu.VMEM((Bp, Hp), jnp.float32),  # h_new kept across vocab tiles
                pltpu.VMEM((Bp, 1), jnp.float32),   # running max
                pltpu.VMEM((Bp, 1), jnp.float32),   # running sum of exp
            ],
        ),
        compiler_params=pltpu.CompilerParams(
            # vocab axis carries the online-lse scratch -> must stay serial
            dimension_semantics=("arbitrary",),
            vmem_limit_bytes=m["vmem_limit_bytes"],
        ),
    )(x, h, a["w_ih"], a["w_hh"], a["b_ih"], a["b_hh"], a["w_out"], a["b_out"])

    # Final log-softmax correction (cheap broadcast subtract) + de-padding.
    log_probs = logits[:B, :V] - lse[:B]
    return log_probs, h_new[:B, :H].reshape(1, B, H)


def init_params(key, out_vocab_size, embed_size, hidden_size):
    ks = jax.random.split(key, 7)
    bound = 1.0 / jnp.sqrt(jnp.float32(hidden_size))
    u = lambda k, shape, b: jax.random.uniform(k, shape, jnp.float32, -b, b)
    return {
        # nn.Embedding default init ~ N(0, 1)
        "embedding": jax.random.normal(ks[0], (out_vocab_size, embed_size),
                                       jnp.float32),
        # GRU weights, stored pre-transposed: (in, 3H) with gate order r|z|n
        "w_ih": u(ks[1], (embed_size, 3 * hidden_size), bound),
        "w_hh": u(ks[2], (hidden_size, 3 * hidden_size), bound),
        "b_ih": u(ks[3], (1, 3 * hidden_size), bound),
        "b_hh": u(ks[4], (1, 3 * hidden_size), bound),
        # Linear(hidden, vocab), stored pre-transposed: (H, V)
        "w_out": u(ks[5], (hidden_size, out_vocab_size), bound),
        "b_out": u(ks[6], (1, out_vocab_size), bound),
    }


def _reference(inputs, hidden, params):
    """Pure-JAX f32 reference of the PyTorch Decoder forward."""
    x = jnp.maximum(jnp.take(params["embedding"], inputs, axis=0), 0.0)
    h = hidden[0]
    gi = x @ params["w_ih"] + params["b_ih"]
    gh = h @ params["w_hh"] + params["b_hh"]
    i_r, i_z, i_n = jnp.split(gi, 3, axis=1)
    h_r, h_z, h_n = jnp.split(gh, 3, axis=1)
    r = jax.nn.sigmoid(i_r + h_r)
    z = jax.nn.sigmoid(i_z + h_z)
    n = jnp.tanh(i_n + r * h_n)
    h_new = (1.0 - z) * n + z * h
    logits = h_new @ params["w_out"] + params["b_out"]
    return jax.nn.log_softmax(logits, axis=1), h_new[None]


if __name__ == "__main__":
    out_vocab_size = 64
    embed_size = 32
    hidden_size = 32
    batch_size = 2

    key = jax.random.PRNGKey(0)
    k_param, k_tok, k_hid = jax.random.split(key, 3)

    params = init_params(k_param, out_vocab_size, embed_size, hidden_size)
    inputs = jax.random.randint(k_tok, (batch_size,), 0, out_vocab_size,
                                dtype=jnp.int32)
    hidden = jax.random.normal(k_hid, (1, batch_size, hidden_size), jnp.float32)

    prepared = prepare_params(params, batch_size)
    fwd = jax.jit(lambda tok, hid: decoder_forward(tok, hid, prepared))

    log_probs, new_hidden = fwd(inputs, hidden)
    jax.block_until_ready((log_probs, new_hidden))

    assert log_probs.shape == (batch_size, out_vocab_size)
    assert new_hidden.shape == (1, batch_size, hidden_size)
    # log-softmax rows should exponentiate-sum to ~1
    assert bool(jnp.allclose(jnp.sum(jnp.exp(log_probs), axis=1), 1.0, atol=1e-4))

    # numerics vs f32 reference (bf16 matmul operands -> loose tolerance)
    ref_logp, ref_hidden = _reference(inputs, hidden, params)
    assert bool(jnp.allclose(log_probs, ref_logp, atol=3e-2, rtol=3e-2))
    assert bool(jnp.allclose(new_hidden, ref_hidden, atol=3e-2, rtol=3e-2))

    print("KERNEL_OK")
</pallas_src>

<mosaic_0001>
module attributes {stable_mosaic.version = 11 : i64} {
  func.func @_decoder_kernel(%arg0: i32, %arg1: memref<8x128xf32, #tpu.memory_space<vmem>>, %arg2: memref<8x128xf32, #tpu.memory_space<vmem>>, %arg3: memref<128x384xbf16, #tpu.memory_space<vmem>>, %arg4: memref<128x384xbf16, #tpu.memory_space<vmem>>, %arg5: memref<1x384xf32, #tpu.memory_space<vmem>>, %arg6: memref<1x384xf32, #tpu.memory_space<vmem>>, %arg7: memref<128x128xbf16, #tpu.memory_space<vmem>>, %arg8: memref<1x128xf32, #tpu.memory_space<vmem>>, %arg9: memref<8x128xf32, #tpu.memory_space<vmem>>, %arg10: memref<8x128xf32, #tpu.memory_space<vmem>>, %arg11: memref<8x1xf32, #tpu.memory_space<vmem>>, %arg12: memref<8x128xf32, #tpu.memory_space<vmem>>, %arg13: memref<8x1xf32, #tpu.memory_space<vmem>>, %arg14: memref<8x1xf32, #tpu.memory_space<vmem>>) attributes {dimension_semantics = [#tpu.dimension_semantics<arbitrary>], iteration_bounds = array<i64: 1>, scalar_prefetch = 0 : i64, scratch_operands = 3 : i64, tpu.core_type = #tpu.core_type<tc>, window_params = [{pipeline_mode = #tpu.pipeline_mode<synchronous>, transform_indices = @transform_0, window_bounds = array<i64: 8, 128>}, {pipeline_mode = #tpu.pipeline_mode<synchronous>, transform_indices = @transform_1, window_bounds = array<i64: 8, 128>}, {pipeline_mode = #tpu.pipeline_mode<synchronous>, transform_indices = @transform_2, window_bounds = array<i64: 128, 384>}, {pipeline_mode = #tpu.pipeline_mode<synchronous>, transform_indices = @transform_3, window_bounds = array<i64: 128, 384>}, {pipeline_mode = #tpu.pipeline_mode<synchronous>, transform_indices = @transform_4, window_bounds = array<i64: 1, 384>}, {pipeline_mode = #tpu.pipeline_mode<synchronous>, transform_indices = @transform_5, window_bounds = array<i64: 1, 384>}, {transform_indices = @transform_6, window_bounds = array<i64: 128, 128>}, {transform_indices = @transform_7, window_bounds = array<i64: 1, 128>}, {transform_indices = @transform_8, window_bounds = array<i64: 8, 128>}, {pipeline_mode = #tpu.pipeline_mode<synchronous>, transform_indices = @transform_9, window_bounds = array<i64: 8, 128>}, {pipeline_mode = #tpu.pipeline_mode<synchronous>, transform_indices = @transform_10, window_bounds = array<i64: 8, 1>}]} {
    %c0_i32 = arith.constant 0 : i32
    %0 = arith.cmpi eq, %arg0, %c0_i32 : i32
    %1 = arith.extui %0 : i1 to i32
    %c0_i32_0 = arith.constant 0 : i32
    %2 = arith.cmpi ne, %1, %c0_i32_0 : i32
    scf.if %2 {
      %c0_20 = arith.constant 0 : index
      %c0_21 = arith.constant 0 : index
      %30 = vector.load %arg1[%c0_20, %c0_21] : memref<8x128xf32, #tpu.memory_space<vmem>>, vector<8x128xf32>
      %cst_22 = arith.constant 0.000000e+00 : f32
      %31 = vector.broadcast %cst_22 : f32 to vector<8x128xf32>
      %32 = arith.maximumf %30, %31 : vector<8x128xf32>
      %c0_23 = arith.constant 0 : index
      %c0_24 = arith.constant 0 : index
      %33 = vector.load %arg2[%c0_23, %c0_24] : memref<8x128xf32, #tpu.memory_space<vmem>>, vector<8x128xf32>
      %34 = arith.truncf %32 : vector<8x128xf32> to vector<8x128xbf16>
      %c0_25 = arith.constant 0 : index
      %c0_26 = arith.constant 0 : index
      %35 = vector.load %arg3[%c0_25, %c0_26] : memref<128x384xbf16, #tpu.memory_space<vmem>>, vector<128x384xbf16>
      %cst_27 = arith.constant dense<0.000000e+00> : vector<8x384xf32>
      %36 = tpu.matmul %34, %35, %cst_27 {dimension_numbers = #tpu.dot_dimension_numbers<[1], [0], [0], [1], [0, 0, 1, 1], [], []>} : vector<8x128xbf16>, vector<128x384xbf16>, vector<8x384xf32> -> vector<8x384xf32>
      %c0_28 = arith.constant 0 : index
      %c0_29 = arith.constant 0 : index
      %37 = vector.load %arg5[%c0_28, %c0_29] : memref<1x384xf32, #tpu.memory_space<vmem>>, vector<1x384xf32>
      %38 = vector.broadcast %37 : vector<1x384xf32> to vector<8x384xf32>
      %39 = arith.addf %36, %38 : vector<8x384xf32>
      %40 = arith.truncf %33 : vector<8x128xf32> to vector<8x128xbf16>
      %c0_30 = arith.constant 0 : index
      %c0_31 = arith.constant 0 : index
      %41 = vector.load %arg4[%c0_30, %c0_31] : memref<128x384xbf16, #tpu.memory_space<vmem>>, vector<128x384xbf16>
      %cst_32 = arith.constant dense<0.000000e+00> : vector<8x384xf32>
      %42 = tpu.matmul %40, %41, %cst_32 {dimension_numbers = #tpu.dot_dimension_numbers<[1], [0], [0], [1], [0, 0, 1, 1], [], []>} : vector<8x128xbf16>, vector<128x384xbf16>, vector<8x384xf32> -> vector<8x384xf32>
      %c0_33 = arith.constant 0 : index
      %c0_34 = arith.constant 0 : index
      %43 = vector.load %arg6[%c0_33, %c0_34] : memref<1x384xf32, #tpu.memory_space<vmem>>, vector<1x384xf32>
      %44 = vector.broadcast %43 : vector<1x384xf32> to vector<8x384xf32>
      %45 = arith.addf %42, %44 : vector<8x384xf32>
      %46 = vector.extract_strided_slice %39 {offsets = [0, 0], sizes = [8, 128], strides = [1, 1]} : vector<8x384xf32> to vector<8x128xf32>
      %47 = vector.extract_strided_slice %39 {offsets = [0, 128], sizes = [8, 128], strides = [1, 1]} : vector<8x384xf32> to vector<8x128xf32>
      %48 = vector.extract_strided_slice %39 {offsets = [0, 256], sizes = [8, 128], strides = [1, 1]} : vector<8x384xf32> to vector<8x128xf32>
      %49 = vector.extract_strided_slice %45 {offsets = [0, 0], sizes = [8, 128], strides = [1, 1]} : vector<8x384xf32> to vector<8x128xf32>
      %50 = vector.extract_strided_slice %45 {offsets = [0, 128], sizes = [8, 128], strides = [1, 1]} : vector<8x384xf32> to vector<8x128xf32>
      %51 = vector.extract_strided_slice %45 {offsets = [0, 256], sizes = [8, 128], strides = [1, 1]} : vector<8x384xf32> to vector<8x128xf32>
      %52 = arith.addf %46, %49 : vector<8x128xf32>
      %53 = arith.negf %52 : vector<8x128xf32>
      %54 = math.exp %53 : vector<8x128xf32>
      %cst_35 = arith.constant 1.000000e+00 : f32
      %55 = vector.broadcast %cst_35 : f32 to vector<8x128xf32>
      %56 = arith.addf %55, %54 : vector<8x128xf32>
      %57 = arith.divf %55, %56 : vector<8x128xf32>
      %58 = arith.addf %47, %50 : vector<8x128xf32>
      %59 = arith.negf %58 : vector<8x128xf32>
      %60 = math.exp %59 : vector<8x128xf32>
      %cst_36 = arith.constant 1.000000e+00 : f32
      %61 = vector.broadcast %cst_36 : f32 to vector<8x128xf32>
      %62 = arith.addf %61, %60 : vector<8x128xf32>
      %63 = arith.divf %61, %62 : vector<8x128xf32>
      %64 = arith.mulf %57, %51 : vector<8x128xf32>
      %65 = arith.addf %48, %64 : vector<8x128xf32>
      %66 = math.tanh %65 : vector<8x128xf32>
      %cst_37 = arith.constant 1.000000e+00 : f32
      %67 = vector.broadcast %cst_37 : f32 to vector<8x128xf32>
      %68 = arith.subf %67, %63 : vector<8x128xf32>
      %69 = arith.mulf %68, %66 : vector<8x128xf32>
      %70 = arith.mulf %63, %33 : vector<8x128xf32>
      %71 = arith.addf %69, %70 : vector<8x128xf32>
      %c0_38 = arith.constant 0 : index
      %c0_39 = arith.constant 0 : index
      %72 = vector.load %arg12[%c0_38, %c0_39] : memref<8x128xf32, #tpu.memory_space<vmem>>, vector<8x128xf32>
      tpu.vector_store %arg12[%c0_38, %c0_39], %71 {strides = array<i32>} : memref<8x128xf32, #tpu.memory_space<vmem>>, vector<8x128xf32>,
      %cst_40 = arith.constant -1.000000e+30 : f32
      %73 = vector.broadcast %cst_40 : f32 to vector<8x1xf32>
      %c0_41 = arith.constant 0 : index
      %c0_42 = arith.constant 0 : index
      %74 = vector.load %arg13[%c0_41, %c0_42] : memref<8x1xf32, #tpu.memory_space<vmem>>, vector<8x1xf32>
      tpu.vector_store %arg13[%c0_41, %c0_42], %73 {strides = array<i32>} : memref<8x1xf32, #tpu.memory_space<vmem>>, vector<8x1xf32>,
      %cst_43 = arith.constant 0.000000e+00 : f32
      %75 = vector.broadcast %cst_43 : f32 to vector<8x1xf32>
      %c0_44 = arith.constant 0 : index
      %c0_45 = arith.constant 0 : index
      %76 = vector.load %arg14[%c0_44, %c0_45] : memref<8x1xf32, #tpu.memory_space<vmem>>, vector<8x1xf32>
      tpu.vector_store %arg14[%c0_44, %c0_45], %75 {strides = array<i32>} : memref<8x1xf32, #tpu.memory_space<vmem>>, vector<8x1xf32>,
    } else {
    }
    %c0 = arith.constant 0 : index
    %c0_1 = arith.constant 0 : index
    %3 = vector.load %arg12[%c0, %c0_1] : memref<8x128xf32, #tpu.memory_space<vmem>>, vector<8x128xf32>
    %4 = arith.truncf %3 : vector<8x128xf32> to vector<8x128xbf16>
    %c0_2 = arith.constant 0 : index
    %c0_3 = arith.constant 0 : index
    %5 = vector.load %arg7[%c0_2, %c0_3] : memref<128x128xbf16, #tpu.memory_space<vmem>>, vector<128x128xbf16>
    %cst = arith.constant dense<0.000000e+00> : vector<8x128xf32>
    %6 = tpu.matmul %4, %5, %cst {dimension_numbers = #tpu.dot_dimension_numbers<[1], [0], [0], [1], [0, 0, 1, 1], [], []>} : vector<8x128xbf16>, vector<128x128xbf16>, vector<8x128xf32> -> vector<8x128xf32>
    %c0_4 = arith.constant 0 : index
    %c0_5 = arith.constant 0 : index
    %7 = vector.load %arg8[%c0_4, %c0_5] : memref<1x128xf32, #tpu.memory_space<vmem>>, vector<1x128xf32>
    %8 = vector.broadcast %7 : vector<1x128xf32> to vector<8x128xf32>
    %9 = arith.addf %6, %8 : vector<8x128xf32>
    %c0_6 = arith.constant 0 : index
    %c0_7 = arith.constant 0 : index
    %10 = vector.load %arg9[%c0_6, %c0_7] : memref<8x128xf32, #tpu.memory_space<vmem>>, vector<8x128xf32>
    tpu.vector_store %arg9[%c0_6, %c0_7], %9 {strides = array<i32>} : memref<8x128xf32, #tpu.memory_space<vmem>>, vector<8x128xf32>,
    %c0_8 = arith.constant 0 : index
    %c0_9 = arith.constant 0 : index
    %11 = vector.load %arg13[%c0_8, %c0_9] : memref<8x1xf32, #tpu.memory_space<vmem>>, vector<8x1xf32>
    %cst_10 = arith.constant dense<0xFF800000> : vector<8xf32>
    %12 = vector.multi_reduction <maximumf>, %9, %cst_10 [1] : vector<8x128xf32> to vector<8xf32>
    %13 = vector.shape_cast %12 : vector<8xf32> to vector<8x1xf32>
    %14 = arith.maximumf %11, %13 : vector<8x1xf32>
    %c0_11 = arith.constant 0 : index
    %c0_12 = arith.constant 0 : index
    %15 = vector.load %arg14[%c0_11, %c0_12] : memref<8x1xf32, #tpu.memory_space<vmem>>, vector<8x1xf32>
    %16 = arith.subf %11, %14 : vector<8x1xf32>
    %17 = math.exp %16 : vector<8x1xf32>
    %18 = arith.mulf %15, %17 : vector<8x1xf32>
    %19 = vector.broadcast %14 : vector<8x1xf32> to vector<8x128xf32>
    %20 = arith.subf %9, %19 : vector<8x128xf32>
    %21 = math.exp %20 : vector<8x128xf32>
    %cst_13 = arith.constant dense<0.000000e+00> : vector<8xf32>
    %22 = vector.multi_reduction <add>, %21, %cst_13 [1] : vector<8x128xf32> to vector<8xf32>
    %23 = vector.shape_cast %22 : vector<8xf32> to vector<8x1xf32>
    %24 = arith.addf %18, %23 : vector<8x1xf32>
    %c0_14 = arith.constant 0 : index
    %c0_15 = arith.constant 0 : index
    %25 = vector.load %arg14[%c0_14, %c0_15] : memref<8x1xf32, #tpu.memory_space<vmem>>, vector<8x1xf32>
    tpu.vector_store %arg14[%c0_14, %c0_15], %24 {strides = array<i32>} : memref<8x1xf32, #tpu.memory_space<vmem>>, vector<8x1xf32>,
    %c0_16 = arith.constant 0 : index
    %c0_17 = arith.constant 0 : index
    %26 = vector.load %arg13[%c0_16, %c0_17] : memref<8x1xf32, #tpu.memory_space<vmem>>, vector<8x1xf32>
    tpu.vector_store %arg13[%c0_16, %c0_17], %14 {strides = array<i32>} : memref<8x1xf32, #tpu.memory_space<vmem>>, vector<8x1xf32>,
    %c0_i32_18 = arith.constant 0 : i32
    %27 = arith.cmpi eq, %arg0, %c0_i32_18 : i32
    %28 = arith.extui %27 : i1 to i32
    %c0_i32_19 = arith.constant 0 : i32
    %29 = arith.cmpi ne, %28, %c0_i32_19 : i32
    scf.if %29 {
      %c0_20 = arith.constant 0 : index
      %c0_21 = arith.constant 0 : index
      %30 = vector.load %arg12[%c0_20, %c0_21] : memref<8x128xf32, #tpu.memory_space<vmem>>, vector<8x128xf32>
      %c0_22 = arith.constant 0 : index
      %c0_23 = arith.constant 0 : index
      %31 = vector.load %arg10[%c0_22, %c0_23] : memref<8x128xf32, #tpu.memory_space<vmem>>, vector<8x128xf32>
      tpu.vector_store %arg10[%c0_22, %c0_23], %30 {strides = array<i32>} : memref<8x128xf32, #tpu.memory_space<vmem>>, vector<8x128xf32>,
      %c0_24 = arith.constant 0 : index
      %c0_25 = arith.constant 0 : index
      %32 = vector.load %arg13[%c0_24, %c0_25] : memref<8x1xf32, #tpu.memory_space<vmem>>, vector<8x1xf32>
      %c0_26 = arith.constant 0 : index
      %c0_27 = arith.constant 0 : index
      %33 = vector.load %arg14[%c0_26, %c0_27] : memref<8x1xf32, #tpu.memory_space<vmem>>, vector<8x1xf32>
      %34 = math.log %33 : vector<8x1xf32>
      %35 = arith.addf %32, %34 : vector<8x1xf32>
      %c0_28 = arith.constant 0 : index
      %c0_29 = arith.constant 0 : index
      %36 = vector.load %arg11[%c0_28, %c0_29] : memref<8x1xf32, #tpu.memory_space<vmem>>, vector<8x1xf32>
      tpu.vector_store %arg11[%c0_28, %c0_29], %35 {strides = array<i32>} : memref<8x1xf32, #tpu.memory_space<vmem>>, vector<8x1xf32>,
    } else {
    }
    return
  }
  func.func @transform_0(%arg0: i32) -> (i32, i32) {
    %c0_i32 = arith.constant 0 : i32
    %c0_i32_0 = arith.constant 0 : i32
    %c0_i32_1 = arith.constant 0 : i32
    return %c0_i32, %c0_i32_0 : i32, i32
  }
  func.func @transform_1(%arg0: i32) -> (i32, i32) {
    %c0_i32 = arith.constant 0 : i32
    %c0_i32_0 = arith.constant 0 : i32
    %c0_i32_1 = arith.constant 0 : i32
    return %c0_i32, %c0_i32_0 : i32, i32
  }
  func.func @transform_2(%arg0: i32) -> (i32, i32) {
    %c0_i32 = arith.constant 0 : i32
    %c0_i32_0 = arith.constant 0 : i32
    %c0_i32_1 = arith.constant 0 : i32
    return %c0_i32, %c0_i32_0 : i32, i32
  }
  func.func @transform_3(%arg0: i32) -> (i32, i32) {
    %c0_i32 = arith.constant 0 : i32
    %c0_i32_0 = arith.constant 0 : i32
    %c0_i32_1 = arith.constant 0 : i32
    return %c0_i32, %c0_i32_0 : i32, i32
  }
  func.func @transform_4(%arg0: i32) -> (i32, i32) {
    %c0_i32 = arith.constant 0 : i32
    %c0_i32_0 = arith.constant 0 : i32
    %c0_i32_1 = arith.constant 0 : i32
    return %c0_i32, %c0_i32_0 : i32, i32
  }
  func.func @transform_5(%arg0: i32) -> (i32, i32) {
    %c0_i32 = arith.constant 0 : i32
    %c0_i32_0 = arith.constant 0 : i32
    %c0_i32_1 = arith.constant 0 : i32
    return %c0_i32, %c0_i32_0 : i32, i32
  }
  func.func @transform_6(%arg0: i32) -> (i32, i32) {
    %c0_i32 = arith.constant 0 : i32
    %c0_i32_0 = arith.constant 0 : i32
    return %c0_i32, %arg0 : i32, i32
  }
  func.func @transform_7(%arg0: i32) -> (i32, i32) {
    %c0_i32 = arith.constant 0 : i32
    %c0_i32_0 = arith.constant 0 : i32
    return %c0_i32, %arg0 : i32, i32
  }
  func.func @transform_8(%arg0: i32) -> (i32, i32) {
    %c0_i32 = arith.constant 0 : i32
    %c0_i32_0 = arith.constant 0 : i32
    return %c0_i32, %arg0 : i32, i32
  }
  func.func @transform_9(%arg0: i32) -> (i32, i32) {
    %c0_i32 = arith.constant 0 : i32
    %c0_i32_0 = arith.constant 0 : i32
    %c0_i32_1 = arith.constant 0 : i32
    return %c0_i32, %c0_i32_0 : i32, i32
  }
  func.func @transform_10(%arg0: i32) -> (i32, i32) {
    %c0_i32 = arith.constant 0 : i32
    %c0_i32_0 = arith.constant 0 : i32
    %c0_i32_1 = arith.constant 0 : i32
    return %c0_i32, %c0_i32_0 : i32, i32
  }
}

</mosaic_0001>

<llo_original>
// kernel: _lambda_.1
$region0: #{_lambda_.1}
  #allocation0 [shape = 'u32[]', space=smem, size = 0x4, offset = 0x4, fixed_abs, tag = 'smem constant byte address 0x4 - core index']
  #allocation1 [shape = 'u32[144,128]{1,0:T(1,128)}', space=vmem, size = 0x12000, scoped, tag = 'internal scratch']
  #allocation2 [shape = 'f32[8,128]{1,0:T(8,128)}', space=vmem, size = 0x1000, scoped, tag = 'scratch operand']
  #allocation3 [shape = 'f32[8,1]{1,0:T(8,128)}', space=vmem, size = 0x1000, scoped, tag = 'scratch operand']
  #allocation4 [shape = 'f32[8,1]{1,0:T(8,128)}', space=vmem, size = 0x1000, scoped, tag = 'scratch operand']
  %s0 = inlined_call_operand.vmem [shape: f32[8,128], index: 0, kind: input, shape index: {}]
  %s1 = inlined_call_operand.vmem [shape: f32[8,128], index: 1, kind: input, shape index: {}]
  %s2 = inlined_call_operand.vmem [shape: bf16[128,384], index: 2, kind: input, shape index: {}]
  %s3 = inlined_call_operand.vmem [shape: bf16[128,384], index: 3, kind: input, shape index: {}]
  %s4 = inlined_call_operand.vmem [shape: f32[1,384], index: 4, kind: input, shape index: {}]
  %s5 = inlined_call_operand.vmem [shape: f32[1,384], index: 5, kind: input, shape index: {}]
  %s6 = inlined_call_operand.vmem [shape: bf16[128,128], index: 6, kind: input, shape index: {}]
  %s7 = inlined_call_operand.vmem [shape: f32[1,128], index: 7, kind: input, shape index: {}]
  %s8 = inlined_call_operand.vmem [shape: f32[8,128], index: 8, kind: output, shape index: {0}]
  %s9 = inlined_call_operand.vmem [shape: f32[8,128], index: 9, kind: output, shape index: {1}]
  %s10 = inlined_call_operand.vmem [shape: f32[8,1], index: 10, kind: output, shape index: {2}]
  %11 = xla_tuple %s8, %s9, %s10
  %s12 = sld [smem:[#allocation0]]
  $region66: #{_lambda_.1} parent=0
    _
  %s14 = ssub.s32 1, %s12
  %s15 = scalar_select 0, %s14, %s12
  // Predicated region
  $region2: #{_lambda_.1} parent=0 // pred_check
    _
  $region3: #{_lambda_.1} parent=0 // pred_check_branch
    %17 = sbr.rel (0) target = $region5
  $region4: #{_lambda_.1} parent=0 // pred_region
    _
  $region5: #{_lambda_.1} parent=0 // pred_fallthru
    _
  // Predicated region
  $region6: #{_lambda_.1} parent=0 // pred_check
    _
  $region7: #{_lambda_.1} parent=0 // pred_check_branch
    %19 = sbr.rel (0) target = $region9
  $region8: #{_lambda_.1} parent=0 // pred_region
    _
  $region9: #{_lambda_.1} parent=0 // pred_fallthru
    _
  // Predicated region
  $region10: #{_lambda_.1} parent=0 // pred_check
    _
  $region11: #{_lambda_.1} parent=0 // pred_check_branch
    %21 = sbr.rel (0) target = $region13
  $region12: #{_lambda_.1} parent=0 // pred_region
    _
  $region13: #{_lambda_.1} parent=0 // pred_fallthru
    _
  // Predicated region
  $region14: #{_lambda_.1} parent=0 // pred_check
    _
  $region15: #{_lambda_.1} parent=0 // pred_check_branch
    %23 = sbr.rel (0) target = $region17
  $region16: #{_lambda_.1} parent=0 // pred_region
    _
  $region17: #{_lambda_.1} parent=0 // pred_fallthru
    _
  // Predicated region
  $region18: #{_lambda_.1} parent=0 // pred_check
    _
  $region19: #{_lambda_.1} parent=0 // pred_check_branch
    %25 = sbr.rel (0) target = $region21
  $region20: #{_lambda_.1} parent=0 // pred_region
    _
  $region21: #{_lambda_.1} parent=0 // pred_fallthru
    _
  // Predicated region
  $region22: #{_lambda_.1} parent=0 // pred_check
    _
  $region23: #{_lambda_.1} parent=0 // pred_check_branch
    %27 = sbr.rel (0) target = $region25
  $region24: #{_lambda_.1} parent=0 // pred_region
    _
  $region25: #{_lambda_.1} parent=0 // pred_fallthru
    _
  // Predicated region
  $region26: #{_lambda_.1} parent=0 // pred_check
    _
  $region27: #{_lambda_.1} parent=0 // pred_check_branch
    %29 = sbr.rel (0) target = $region29
  $region28: #{_lambda_.1} parent=0 // pred_region
    _
  $region29: #{_lambda_.1} parent=0 // pred_fallthru
    _
  // Predicated region
  $region30: #{_lambda_.1} parent=0 // pred_check
    _
  $region31: #{_lambda_.1} parent=0 // pred_check_branch
    %31 = sbr.rel (0) target = $region33
  $region32: #{_lambda_.1} parent=0 // pred_region
    _
  $region33: #{_lambda_.1} parent=0 // pred_fallthru
    _
  %p33 = scmp.eq.s32.totalorder 0, 0
  // Predicated region
  $region34: #{_lambda_.1} parent=0 // pred_check
    %p34 = pneg %p33
  $region35: #{_lambda_.1} parent=0 // pred_check_branch
    %36 = sbr.rel (%p34) target = $region37
  $region36: #{_lambda_.1} parent=0 // pred_region
    %v37 = vld [vmem:[%s0] sm:$0xff]
    %v38 = vmax.f32 %v37, 0.0
    %v39 = vld [vmem:[%s1] sm:$0xff]
    %v40 = vpack.c.bf16 %v38, %v38
    %v41 = vld [vmem:[%s2] sm:$0xff]
    %v42 = vld [vmem:[%s2 + $0x8] sm:$0xf]
    %v43 = vld [vmem:[%s2 + $0xc] sm:$0xff]
    %v44 = vld [vmem:[%s2 + $0x14] sm:$0xf]
    %v45 = vld [vmem:[%s2 + $0x18] sm:$0xff]
    %v46 = vld [vmem:[%s2 + $0x20] sm:$0xf]
    %v47 = vld [vmem:[%s2 + $0x24] sm:$0xff]
    %v48 = vld [vmem:[%s2 + $0x2c] sm:$0xf]
    %v49 = vld [vmem:[%s2 + $0x30] sm:$0xff]
    %v50 = vld [vmem:[%s2 + $0x38] sm:$0xf]
    %v51 = vld [vmem:[%s2 + $0x3c] sm:$0xff]
    %v52 = vld [vmem:[%s2 + $0x44] sm:$0xf]
    %v53 = vld [vmem:[%s2 + $0x48] sm:$0xff]
    %v54 = vld [vmem:[%s2 + $0x50] sm:$0xf]
    %v55 = vld [vmem:[%s2 + $0x54] sm:$0xff]
    %v56 = vld [vmem:[%s2 + $0x5c] sm:$0xf]
    %v57 = vld [vmem:[%s2 + $0x60] sm:$0xff]
    %v58 = vld [vmem:[%s2 + $0x68] sm:$0xf]
    %v59 = vld [vmem:[%s2 + $0x6c] sm:$0xff]
    %v60 = vld [vmem:[%s2 + $0x74] sm:$0xf]
    %v61 = vld [vmem:[%s2 + $0x78] sm:$0xff]
    %v62 = vld [vmem:[%s2 + $0x80] sm:$0xf]
    %v63 = vld [vmem:[%s2 + $0x84] sm:$0xff]
    %v64 = vld [vmem:[%s2 + $0x8c] sm:$0xf]
    %v65 = vld [vmem:[%s2 + $0x90] sm:$0xff]
    %v66 = vld [vmem:[%s2 + $0x98] sm:$0xf]
    %v67 = vld [vmem:[%s2 + $0x9c] sm:$0xff]
    %v68 = vld [vmem:[%s2 + $0xa4] sm:$0xf]
    %v69 = vld [vmem:[%s2 + $0xa8] sm:$0xff]
    %v70 = vld [vmem:[%s2 + $0xb0] sm:$0xf]
    %v71 = vld [vmem:[%s2 + $0xb4] sm:$0xff]
    %v72 = vld [vmem:[%s2 + $0xbc] sm:$0xf]
    %v73 = vld [vmem:[%s4] sm:$0x7]
    %v75 = vlaneseq
    %v76 = vshrl.u32 %v75, 7
    %v77 = vsub.s32 0, %v76
    %v78 = vrot.slane %v73, %v77
    %v79 = vlaneseq
    %v80 = vshrl.u32 %v79, 7
    %v81 = vsub.s32 1, %v80
    %v82 = vrot.slane %v73, %v81
    %v83 = vlaneseq
    %v84 = vshrl.u32 %v83, 7
    %v85 = vsub.s32 2, %v84
    %v86 = vrot.slane %v73, %v85
    %v122 = vunpack.c.l.b16 %v41
    %v123 = vunpack.c.h.b16 %v41
    %v124 = vunpack.c.l.b16 %v42
    %v125 = vunpack.c.l.b16 %v43
    %v126 = vunpack.c.h.b16 %v43
    %v127 = vunpack.c.l.b16 %v44
    %v128 = vunpack.c.l.b16 %v45
    %v129 = vunpack.c.h.b16 %v45
    %v130 = vunpack.c.l.b16 %v46
    %v131 = vunpack.c.l.b16 %v47
    %v132 = vunpack.c.h.b16 %v47
    %v133 = vunpack.c.l.b16 %v48
    %v134 = vunpack.c.l.b16 %v49
    %v135 = vunpack.c.h.b16 %v49
    %v136 = vunpack.c.l.b16 %v50
    %v137 = vunpack.c.l.b16 %v51
    %v138 = vunpack.c.h.b16 %v51
    %v139 = vunpack.c.l.b16 %v52
    %v140 = vunpack.c.l.b16 %v53
    %v141 = vunpack.c.h.b16 %v53
    %v142 = vunpack.c.l.b16 %v54
    %v143 = vunpack.c.l.b16 %v55
    %v144 = vunpack.c.h.b16 %v55
    %v145 = vunpack.c.l.b16 %v56
    %v146 = vunpack.c.l.b16 %v57
    %v147 = vunpack.c.h.b16 %v57
    %v148 = vunpack.c.l.b16 %v58
    %v149 = vunpack.c.l.b16 %v59
    %v150 = vunpack.c.h.b16 %v59
    %v151 = vunpack.c.l.b16 %v60
    %v152 = vunpack.c.l.b16 %v61
    %v153 = vunpack.c.h.b16 %v61
    %v154 = vunpack.c.l.b16 %v62
    %v155 = vunpack.c.l.b16 %v63
    %v156 = vunpack.c.h.b16 %v63
    %v157 = vunpack.c.l.b16 %v64
    %v158 = vunpack.c.l.b16 %v65
    %v159 = vunpack.c.h.b16 %v65
    %v160 = vunpack.c.l.b16 %v66
    %v161 = vunpack.c.l.b16 %v67
    %v162 = vunpack.c.h.b16 %v67
    %v163 = vunpack.c.l.b16 %v68
    %v164 = vunpack.c.l.b16 %v69
    %v165 = vunpack.c.h.b16 %v69
    %v166 = vunpack.c.l.b16 %v70
    %v167 = vunpack.c.l.b16 %v71
    %v168 = vunpack.c.h.b16 %v71
    %v169 = vunpack.c.l.b16 %v72
    %v170 = vpack.c.b16 %v125, %v122
    %v171 = vpack.c.b16 %v126, %v123
    %v172 = vpack.c.b16 %v127, %v124
    %v173 = vpack.c.b16 %v131, %v128
    %v174 = vpack.c.b16 %v132, %v129
    %v175 = vpack.c.b16 %v133, %v130
    %v176 = vpack.c.b16 %v137, %v134
    %v177 = vpack.c.b16 %v138, %v135
    %v178 = vpack.c.b16 %v139, %v136
    %v179 = vpack.c.b16 %v143, %v140
    %v180 = vpack.c.b16 %v144, %v141
    %v181 = vpack.c.b16 %v145, %v142
    %v182 = vpack.c.b16 %v149, %v146
    %v183 = vpack.c.b16 %v150, %v147
    %v184 = vpack.c.b16 %v151, %v148
    %v185 = vpack.c.b16 %v155, %v152
    %v186 = vpack.c.b16 %v156, %v153
    %v187 = vpack.c.b16 %v157, %v154
    %v188 = vpack.c.b16 %v161, %v158
    %v189 = vpack.c.b16 %v162, %v159
    %v190 = vpack.c.b16 %v163, %v160
    %v191 = vpack.c.b16 %v167, %v164
    %v192 = vpack.c.b16 %v168, %v165
    %v193 = vpack.c.b16 %v169, %v166
    %218 = vmatprep.subr.bf16.mxu0 %v171
    %219 = vmatpush1.bf16.msra.mxu0 %v170
    %220 = vmatprep.subr.bf16.mxu0 %v174
    %221 = vmatpush1.bf16.msra.mxu0 %v173
    %222 = vmatprep.subr.bf16.mxu0 %v177
    %223 = vmatpush1.bf16.msra.mxu0 %v176
    %224 = vmatprep.subr.bf16.mxu0 %v180
    %225 = vmatpush1.bf16.msra.mxu0 %v179
    %226 = vmatprep.subr.bf16.mxu0 %v183
    %227 = vmatpush1.bf16.msra.mxu0 %v182
    %228 = vmatprep.subr.bf16.mxu0 %v186
    %229 = vmatpush1.bf16.msra.mxu0 %v185
    %230 = vmatprep.subr.bf16.mxu0 %v189
    %231 = vmatpush1.bf16.msra.mxu0 %v188
    %232 = vmatprep.subr.bf16.mxu0 %v192
    %233 = vmatpush1.bf16.msra.mxu0 %v191
    %234 = vmatprep.subr.bf16.mxu0 0
    %235 = vmatpush1.bf16.msra.mxu0 0
    %236 = vmatprep.subr.bf16.mxu0 0
    %237 = vmatpush1.bf16.msra.mxu0 0
    %238 = vmatprep.subr.bf16.mxu0 0
    %239 = vmatpush1.bf16.msra.mxu0 0
    %240 = vmatprep.subr.bf16.mxu0 0
    %241 = vmatpush1.bf16.msra.mxu0 0
    %242 = vmatprep.subr.bf16.mxu0 0
    %243 = vmatpush1.bf16.msra.mxu0 0
    %244 = vmatprep.subr.bf16.mxu0 0
    %245 = vmatpush1.bf16.msra.mxu0 0
    %246 = vmatprep.subr.bf16.mxu0 0
    %247 = vmatpush1.bf16.msra.mxu0 0
    %248 = vmatprep.subr.bf16.mxu0 0
    %249 = vmatpush1.bf16.msra.mxu0 0
    %250 = vmatprep.mubr.bf16.mxu0 0
    %251 = vmatmul.mubr.bf16.gmra.mrb[0].mxu0 %v40
    %v252 = vpop.f32.mrb[0].mxu0
    %v253 = vadd.f32 %v78, %v252
    %v254 = vpop.f32.mrb[0].mxu0
    %v255 = vadd.f32 %v82, %v254
    %v256 = vpop.f32.mrb[0].mxu0
    %v257 = vpop.f32.mrb[0].mxu0
    %258 = vdwg.mxu0
    %259 = vmatprep.subr.bf16.mxu0 0
    %260 = vmatpush1.bf16.msra.mxu0 %v172
    %261 = vmatprep.subr.bf16.mxu0 0
    %262 = vmatpush1.bf16.msra.mxu0 %v175
    %263 = vmatprep.subr.bf16.mxu0 0
    %264 = vmatpush1.bf16.msra.mxu0 %v178
    %265 = vmatprep.subr.bf16.mxu0 0
    %266 = vmatpush1.bf16.msra.mxu0 %v181
    %267 = vmatprep.subr.bf16.mxu0 0
    %268 = vmatpush1.bf16.msra.mxu0 %v184
    %269 = vmatprep.subr.bf16.mxu0 0
    %270 = vmatpush1.bf16.msra.mxu0 %v187
    %271 = vmatprep.subr.bf16.mxu0 0
    %272 = vmatpush1.bf16.msra.mxu0 %v190
    %273 = vmatprep.subr.bf16.mxu0 0
    %274 = vmatpush1.bf16.msra.mxu0 %v193
    %275 = vmatprep.subr.bf16.mxu0 0
    %276 = vmatpush1.bf16.msra.mxu0 0
    %277 = vmatprep.subr.bf16.mxu0 0
    %278 = vmatpush1.bf16.msra.mxu0 0
    %279 = vmatprep.subr.bf16.mxu0 0
    %280 = vmatpush1.bf16.msra.mxu0 0
    %281 = vmatprep.subr.bf16.mxu0 0
    %282 = vmatpush1.bf16.msra.mxu0 0
    %283 = vmatprep.subr.bf16.mxu0 0
    %284 = vmatpush1.bf16.msra.mxu0 0
    %285 = vmatprep.subr.bf16.mxu0 0
    %286 = vmatpush1.bf16.msra.mxu0 0
    %287 = vmatprep.subr.bf16.mxu0 0
    %288 = vmatpush1.bf16.msra.mxu0 0
    %289 = vmatprep.subr.bf16.mxu0 0
    %290 = vmatpush1.bf16.msra.mxu0 0
    %291 = vmatprep.mubr.bf16.mxu0 0
    %292 = vmatmul.mubr.bf16.gmra.mrb[0].mxu0 %v40
    %v293 = vpop.f32.mrb[0].mxu0
    %v294 = vadd.f32 %v86, %v293
    %v295 = vpop.f32.mrb[0].mxu0
    %v296 = vpop.f32.mrb[0].mxu0
    %v297 = vpop.f32.mrb[0].mxu0
    %298 = vdwg.mxu0
    %v299 = vpack.c.bf16 %v39, %v39
    %v300 = vld [vmem:[%s3] sm:$0xff]
    %v301 = vld [vmem:[%s3 + $0x8] sm:$0xf]
    %v302 = vld [vmem:[%s3 + $0xc] sm:$0xff]
    %v303 = vld [vmem:[%s3 + $0x14] sm:$0xf]
    %v304 = vld [vmem:[%s3 + $0x18] sm:$0xff]
    %v305 = vld [vmem:[%s3 + $0x20] sm:$0xf]
    %v306 = vld [vmem:[%s3 + $0x24] sm:$0xff]
    %v307 = vld [vmem:[%s3 + $0x2c] sm:$0xf]
    %v308 = vld [vmem:[%s3 + $0x30] sm:$0xff]
    %v309 = vld [vmem:[%s3 + $0x38] sm:$0xf]
    %v310 = vld [vmem:[%s3 + $0x3c] sm:$0xff]
    %v311 = vld [vmem:[%s3 + $0x44] sm:$0xf]
    %v312 = vld [vmem:[%s3 + $0x48] sm:$0xff]
    %v313 = vld [vmem:[%s3 + $0x50] sm:$0xf]
    %v314 = vld [vmem:[%s3 + $0x54] sm:$0xff]
    %v315 = vld [vmem:[%s3 + $0x5c] sm:$0xf]
    %v316 = vld [vmem:[%s3 + $0x60] sm:$0xff]
    %v317 = vld [vmem:[%s3 + $0x68] sm:$0xf]
    %v318 = vld [vmem:[%s3 + $0x6c] sm:$0xff]
    %v319 = vld [vmem:[%s3 + $0x74] sm:$0xf]
    %v320 = vld [vmem:[%s3 + $0x78] sm:$0xff]
    %v321 = vld [vmem:[%s3 + $0x80] sm:$0xf]
    %v322 = vld [vmem:[%s3 + $0x84] sm:$0xff]
    %v323 = vld [vmem:[%s3 + $0x8c] sm:$0xf]
    %v324 = vld [vmem:[%s3 + $0x90] sm:$0xff]
    %v325 = vld [vmem:[%s3 + $0x98] sm:$0xf]
    %v326 = vld [vmem:[%s3 + $0x9c] sm:$0xff]
    %v327 = vld [vmem:[%s3 + $0xa4] sm:$0xf]
    %v328 = vld [vmem:[%s3 + $0xa8] sm:$0xff]
    %v329 = vld [vmem:[%s3 + $0xb0] sm:$0xf]
    %v330 = vld [vmem:[%s3 + $0xb4] sm:$0xff]
    %v331 = vld [vmem:[%s3 + $0xbc] sm:$0xf]
    %v332 = vld [vmem:[%s5] sm:$0x7]
    %v334 = vlaneseq
    %v335 = vshrl.u32 %v334, 7
    %v336 = vsub.s32 0, %v335
    %v337 = vrot.slane %v332, %v336
    %v338 = vlaneseq
    %v339 = vshrl.u32 %v338, 7
    %v340 = vsub.s32 1, %v339
    %v341 = vrot.slane %v332, %v340
    %v342 = vlaneseq
    %v343 = vshrl.u32 %v342, 7
    %v344 = vsub.s32 2, %v343
    %v345 = vrot.slane %v332, %v344
    %v381 = vunpack.c.l.b16 %v300
    %v382 = vunpack.c.h.b16 %v300
    %v383 = vunpack.c.l.b16 %v301
    %v384 = vunpack.c.l.b16 %v302
    %v385 = vunpack.c.h.b16 %v302
    %v386 = vunpack.c.l.b16 %v303
    %v387 = vunpack.c.l.b16 %v304
    %v388 = vunpack.c.h.b16 %v304
    %v389 = vunpack.c.l.b16 %v305
    %v390 = vunpack.c.l.b16 %v306
    %v391 = vunpack.c.h.b16 %v306
    %v392 = vunpack.c.l.b16 %v307
    %v393 = vunpack.c.l.b16 %v308
    %v394 = vunpack.c.h.b16 %v308
    %v395 = vunpack.c.l.b16 %v309
    %v396 = vunpack.c.l.b16 %v310
    %v397 = vunpack.c.h.b16 %v310
    %v398 = vunpack.c.l.b16 %v311
    %v399 = vunpack.c.l.b16 %v312
    %v400 = vunpack.c.h.b16 %v312
    %v401 = vunpack.c.l.b16 %v313
    %v402 = vunpack.c.l.b16 %v314
    %v403 = vunpack.c.h.b16 %v314
    %v404 = vunpack.c.l.b16 %v315
    %v405 = vunpack.c.l.b16 %v316
    %v406 = vunpack.c.h.b16 %v316
    %v407 = vunpack.c.l.b16 %v317
    %v408 = vunpack.c.l.b16 %v318
    %v409 = vunpack.c.h.b16 %v318
    %v410 = vunpack.c.l.b16 %v319
    %v411 = vunpack.c.l.b16 %v320
    %v412 = vunpack.c.h.b16 %v320
    %v413 = vunpack.c.l.b16 %v321
    %v414 = vunpack.c.l.b16 %v322
    %v415 = vunpack.c.h.b16 %v322
    %v416 = vunpack.c.l.b16 %v323
    %v417 = vunpack.c.l.b16 %v324
    %v418 = vunpack.c.h.b16 %v324
    %v419 = vunpack.c.l.b16 %v325
    %v420 = vunpack.c.l.b16 %v326
    %v421 = vunpack.c.h.b16 %v326
    %v422 = vunpack.c.l.b16 %v327
    %v423 = vunpack.c.l.b16 %v328
    %v424 = vunpack.c.h.b16 %v328
    %v425 = vunpack.c.l.b16 %v329
    %v426 = vunpack.c.l.b16 %v330
    %v427 = vunpack.c.h.b16 %v330
    %v428 = vunpack.c.l.b16 %v331
    %v429 = vpack.c.b16 %v384, %v381
    %v430 = vpack.c.b16 %v385, %v382
    %v431 = vpack.c.b16 %v386, %v383
    %v432 = vpack.c.b16 %v390, %v387
    %v433 = vpack.c.b16 %v391, %v388
    %v434 = vpack.c.b16 %v392, %v389
    %v435 = vpack.c.b16 %v396, %v393
    %v436 = vpack.c.b16 %v397, %v394
    %v437 = vpack.c.b16 %v398, %v395
    %v438 = vpack.c.b16 %v402, %v399
    %v439 = vpack.c.b16 %v403, %v400
    %v440 = vpack.c.b16 %v404, %v401
    %v441 = vpack.c.b16 %v408, %v405
    %v442 = vpack.c.b16 %v409, %v406
    %v443 = vpack.c.b16 %v410, %v407
    %v444 = vpack.c.b16 %v414, %v411
    %v445 = vpack.c.b16 %v415, %v412
    %v446 = vpack.c.b16 %v416, %v413
    %v447 = vpack.c.b16 %v420, %v417
    %v448 = vpack.c.b16 %v421, %v418
    %v449 = vpack.c.b16 %v422, %v419
    %v450 = vpack.c.b16 %v426, %v423
    %v451 = vpack.c.b16 %v427, %v424
    %v452 = vpack.c.b16 %v428, %v425
    %477 = vmatprep.subr.bf16.mxu0 %v430
    %478 = vmatpush1.bf16.msra.mxu0 %v429
    %479 = vmatprep.subr.bf16.mxu0 %v433
    %480 = vmatpush1.bf16.msra.mxu0 %v432
    %481 = vmatprep.subr.bf16.mxu0 %v436
    %482 = vmatpush1.bf16.msra.mxu0 %v435
    %483 = vmatprep.subr.bf16.mxu0 %v439
    %484 = vmatpush1.bf16.msra.mxu0 %v438
    %485 = vmatprep.subr.bf16.mxu0 %v442
    %486 = vmatpush1.bf16.msra.mxu0 %v441
    %487 = vmatprep.subr.bf16.mxu0 %v445
    %488 = vmatpush1.bf16.msra.mxu0 %v444
    %489 = vmatprep.subr.bf16.mxu0 %v448
    %490 = vmatpush1.bf16.msra.mxu0 %v447
    %491 = vmatprep.subr.bf16.mxu0 %v451
    %492 = vmatpush1.bf16.msra.mxu0 %v450
    %493 = vmatprep.subr.bf16.mxu0 0
    %494 = vmatpush1.bf16.msra.mxu0 0
    %495 = vmatprep.subr.bf16.mxu0 0
    %496 = vmatpush1.bf16.msra.mxu0 0
    %497 = vmatprep.subr.bf16.mxu0 0
    %498 = vmatpush1.bf16.msra.mxu0 0
    %499 = vmatprep.subr.bf16.mxu0 0
    %500 = vmatpush1.bf16.msra.mxu0 0
    %501 = vmatprep.subr.bf16.mxu0 0
    %502 = vmatpush1.bf16.msra.mxu0 0
    %503 = vmatprep.subr.bf16.mxu0 0
    %504 = vmatpush1.bf16.msra.mxu0 0
    %505 = vmatprep.subr.bf16.mxu0 0
    %506 = vmatpush1.bf16.msra.mxu0 0
    %507 = vmatprep.subr.bf16.mxu0 0
    %508 = vmatpush1.bf16.msra.mxu0 0
    %509 = vmatprep.mubr.bf16.mxu0 0
    %510 = vmatmul.mubr.bf16.gmra.mrb[0].mxu0 %v299
    %v511 = vpop.f32.mrb[0].mxu0
    %v512 = vadd.f32 %v337, %v511
    %v513 = vpop.f32.mrb[0].mxu0
    %v514 = vadd.f32 %v341, %v513
    %v515 = vpop.f32.mrb[0].mxu0
    %v516 = vpop.f32.mrb[0].mxu0
    %517 = vdwg.mxu0
    %518 = vmatprep.subr.bf16.mxu0 0
    %519 = vmatpush1.bf16.msra.mxu0 %v431
    %520 = vmatprep.subr.bf16.mxu0 0
    %521 = vmatpush1.bf16.msra.mxu0 %v434
    %522 = vmatprep.subr.bf16.mxu0 0
    %523 = vmatpush1.bf16.msra.mxu0 %v437
    %524 = vmatprep.subr.bf16.mxu0 0
    %525 = vmatpush1.bf16.msra.mxu0 %v440
    %526 = vmatprep.subr.bf16.mxu0 0
    %527 = vmatpush1.bf16.msra.mxu0 %v443
    %528 = vmatprep.subr.bf16.mxu0 0
    %529 = vmatpush1.bf16.msra.mxu0 %v446
    %530 = vmatprep.subr.bf16.mxu0 0
    %531 = vmatpush1.bf16.msra.mxu0 %v449
    %532 = vmatprep.subr.bf16.mxu0 0
    %533 = vmatpush1.bf16.msra.mxu0 %v452
    %534 = vmatprep.subr.bf16.mxu0 0
    %535 = vmatpush1.bf16.msra.mxu0 0
    %536 = vmatprep.subr.bf16.mxu0 0
    %537 = vmatpush1.bf16.msra.mxu0 0
    %538 = vmatprep.subr.bf16.mxu0 0
    %539 = vmatpush1.bf16.msra.mxu0 0
    %540 = vmatprep.subr.bf16.mxu0 0
    %541 = vmatpush1.bf16.msra.mxu0 0
    %542 = vmatprep.subr.bf16.mxu0 0
    %543 = vmatpush1.bf16.msra.mxu0 0
    %544 = vmatprep.subr.bf16.mxu0 0
    %545 = vmatpush1.bf16.msra.mxu0 0
    %546 = vmatprep.subr.bf16.mxu0 0
    %547 = vmatpush1.bf16.msra.mxu0 0
    %548 = vmatprep.subr.bf16.mxu0 0
    %549 = vmatpush1.bf16.msra.mxu0 0
    %550 = vmatprep.mubr.bf16.mxu0 0
    %551 = vmatmul.mubr.bf16.gmra.mrb[0].mxu0 %v299
    %v552 = vpop.f32.mrb[0].mxu0
    %v553 = vadd.f32 %v345, %v552
    %v554 = vpop.f32.mrb[0].mxu0
    %v555 = vpop.f32.mrb[0].mxu0
    %v556 = vpop.f32.mrb[0].mxu0
    %557 = vdwg.mxu0
    %v558 = vadd.f32 %v253, %v512
    %v559 = vxor.u32 %v558, 2147483648
    %v560 = vmul.f32 %v559, 1.442695
    %v561 = vpow.pop %v560
    %v562 = vadd.f32 %v561, 1.0
    %v563 = vrcp.pop %v562
    %v564 = vmul.f32 1.0, %v563
    %v565 = vadd.f32 %v255, %v514
    %v566 = vxor.u32 %v565, 2147483648
    %v567 = vmul.f32 %v566, 1.442695
    %v568 = vpow.pop %v567
    %v569 = vadd.f32 %v568, 1.0
    %v570 = vrcp.pop %v569
    %v571 = vmul.f32 1.0, %v570
    %v572 = vmul.f32 %v564, %v553
    %v573 = vadd.f32 %v294, %v572
    %v574 = vtanh.pop %v573
    %v575 = vsub.f32 1.0, %v571
    %v576 = vmul.f32 %v575, %v574
    %v577 = vmul.f32 %v571, %v39
    %v578 = vadd.f32 %v576, %v577
    %579 = vst [vmem:[#allocation2] sm:$0xff] %v578
    %vm580 = vcmask 7168
    %581 = vst.msk [vmem:[#allocation3] sm:$0xff] %vm580, -1e+30
    %582 = vst.msk [vmem:[#allocation4] sm:$0xff] %vm580, 0.0
  $region37: #{_lambda_.1} parent=0 // pred_fallthru
    _
  %v583 = vld [vmem:[#allocation2] sm:$0xff]
  %v584 = vpack.c.bf16 %v583, %v583
  %v585 = vld [vmem:[%s6] sm:$0xf]
  %v586 = vld [vmem:[%s6 + $0x4] sm:$0xf]
  %v587 = vld [vmem:[%s6 + $0x8] sm:$0xf]
  %v588 = vld [vmem:[%s6 + $0xc] sm:$0xf]
  %v589 = vld [vmem:[%s6 + $0x10] sm:$0xf]
  %v590 = vld [vmem:[%s6 + $0x14] sm:$0xf]
  %v591 = vld [vmem:[%s6 + $0x18] sm:$0xf]
  %v592 = vld [vmem:[%s6 + $0x1c] sm:$0xf]
  %v593 = vld [vmem:[%s6 + $0x20] sm:$0xf]
  %v594 = vld [vmem:[%s6 + $0x24] sm:$0xf]
  %v595 = vld [vmem:[%s6 + $0x28] sm:$0xf]
  %v596 = vld [vmem:[%s6 + $0x2c] sm:$0xf]
  %v597 = vld [vmem:[%s6 + $0x30] sm:$0xf]
  %v598 = vld [vmem:[%s6 + $0x34] sm:$0xf]
  %v599 = vld [vmem:[%s6 + $0x38] sm:$0xf]
  %v600 = vld [vmem:[%s6 + $0x3c] sm:$0xf]
  %v601 = vld [vmem:[%s7] sm:$0x1]
  %v603 = vlaneseq
  %v604 = vshrl.u32 %v603, 7
  %v605 = vsub.s32 0, %v604
  %v606 = vrot.slane %v601, %v605
  %v624 = vunpack.c.l.b16 %v585
  %v625 = vunpack.c.l.b16 %v586
  %v626 = vunpack.c.l.b16 %v587
  %v627 = vunpack.c.l.b16 %v588
  %v628 = vunpack.c.l.b16 %v589
  %v629 = vunpack.c.l.b16 %v590
  %v630 = vunpack.c.l.b16 %v591
  %v631 = vunpack.c.l.b16 %v592
  %v632 = vunpack.c.l.b16 %v593
  %v633 = vunpack.c.l.b16 %v594
  %v634 = vunpack.c.l.b16 %v595
  %v635 = vunpack.c.l.b16 %v596
  %v636 = vunpack.c.l.b16 %v597
  %v637 = vunpack.c.l.b16 %v598
  %v638 = vunpack.c.l.b16 %v599
  %v639 = vunpack.c.l.b16 %v600
  %v640 = vpack.c.b16 %v625, %v624
  %v641 = vpack.c.b16 %v627, %v626
  %v642 = vpack.c.b16 %v629, %v628
  %v643 = vpack.c.b16 %v631, %v630
  %v644 = vpack.c.b16 %v633, %v632
  %v645 = vpack.c.b16 %v635, %v634
  %v646 = vpack.c.b16 %v637, %v636
  %v647 = vpack.c.b16 %v639, %v638
  %656 = vmatprep.subr.bf16.mxu0 0
  %657 = vmatpush1.bf16.msra.mxu0 %v640
  %658 = vmatprep.subr.bf16.mxu0 0
  %659 = vmatpush1.bf16.msra.mxu0 %v641
  %660 = vmatprep.subr.bf16.mxu0 0
  %661 = vmatpush1.bf16.msra.mxu0 %v642
  %662 = vmatprep.subr.bf16.mxu0 0
  %663 = vmatpush1.bf16.msra.mxu0 %v643
  %664 = vmatprep.subr.bf16.mxu0 0
  %665 = vmatpush1.bf16.msra.mxu0 %v644
  %666 = vmatprep.subr.bf16.mxu0 0
  %667 = vmatpush1.bf16.msra.mxu0 %v645
  %668 = vmatprep.subr.bf16.mxu0 0
  %669 = vmatpush1.bf16.msra.mxu0 %v646
  %670 = vmatprep.subr.bf16.mxu0 0
  %671 = vmatpush1.bf16.msra.mxu0 %v647
  %672 = vmatprep.subr.bf16.mxu0 0
  %673 = vmatpush1.bf16.msra.mxu0 0
  %674 = vmatprep.subr.bf16.mxu0 0
  %675 = vmatpush1.bf16.msra.mxu0 0
  %676 = vmatprep.subr.bf16.mxu0 0
  %677 = vmatpush1.bf16.msra.mxu0 0
  %678 = vmatprep.subr.bf16.mxu0 0
  %679 = vmatpush1.bf16.msra.mxu0 0
  %680 = vmatprep.subr.bf16.mxu0 0
  %681 = vmatpush1.bf16.msra.mxu0 0
  %682 = vmatprep.subr.bf16.mxu0 0
  %683 = vmatpush1.bf16.msra.mxu0 0
  %684 = vmatprep.subr.bf16.mxu0 0
  %685 = vmatpush1.bf16.msra.mxu0 0
  %686 = vmatprep.subr.bf16.mxu0 0
  %687 = vmatpush1.bf16.msra.mxu0 0
  %688 = vmatprep.mubr.bf16.mxu0 0
  %689 = vmatmul.mubr.bf16.gmra.mrb[0].mxu0 %v584
  %v690 = vpop.f32.mrb[0].mxu0
  %v691 = vadd.f32 %v606, %v690
  %v692 = vpop.f32.mrb[0].mxu0
  %v693 = vpop.f32.mrb[0].mxu0
  %v694 = vpop.f32.mrb[0].mxu0
  %695 = vdwg.mxu0
  %696 = vst [vmem:[%s8] sm:$0xff] %v691
  %v697 = vld [vmem:[#allocation3] sm:$0xff]
  %698 = vmax.xlane.f32.xlu0 %v691
  %v699 = vpop.xlane.xlu0 %698
  %v700 = vmax.f32 %v697, %v699
  %v701 = vld [vmem:[#allocation4] sm:$0xff]
  %v702 = vsub.f32 %v697, %v700
  %v703 = vmul.f32 %v702, 1.442695
  %v704 = vpow.pop %v703
  %v705 = vmul.f32 %v701, %v704
  %707 = vset.pattern.permute.xlu0 0
  %708 = vperm.xlu0 %707, %v700
  %v709 = vpop.permute.xlu0 %708
  %v711 = vsub.f32 %v691, %v709
  %v712 = vmul.f32 %v711, 1.442695
  %v713 = vpow.pop %v712
  %714 = vadd.xlane.f32.xlu0 %v713
  %v715 = vpop.xlane.xlu0 %714
  %v716 = vadd.f32 %v705, %v715
  %vm717 = vcmask 7168
  %718 = vst.msk [vmem:[#allocation4] sm:$0xff] %vm717, %v716
  %719 = vst.msk [vmem:[#allocation3] sm:$0xff] %vm717, %v700
  // Predicated region
  $region38: #{_lambda_.1} parent=0 // pred_check
    %p720 = pneg %p33
  $region39: #{_lambda_.1} parent=0 // pred_check_branch
    %722 = sbr.rel (%p720) target = $region41
  $region40: #{_lambda_.1} parent=0 // pred_region
    %v723 = vld [vmem:[#allocation2] sm:$0xff]
    %724 = vst [vmem:[%s9] sm:$0xff] %v723
    %v725 = vld [vmem:[#allocation3] sm:$0xff]
    %v726 = vld [vmem:[#allocation4] sm:$0xff]
    %v727 = vlog2.pop %v726
    %v728 = vmul.f32 %v727, 0.6931472
    %v729 = vadd.f32 %v725, %v728
    %730 = vst.msk [vmem:[%s10] sm:$0xff] %vm717, %v729
  $region41: #{_lambda_.1} parent=0 // pred_fallthru
    _
  // Predicated region
  $region42: #{_lambda_.1} parent=0 // pred_check
    _
  $region43: #{_lambda_.1} parent=0 // pred_check_branch
    %732 = sbr.rel (0) target = $region45
  $region44: #{_lambda_.1} parent=0 // pred_region
    _
  $region45: #{_lambda_.1} parent=0 // pred_fallthru
    _
  // Predicated region
  $region46: #{_lambda_.1} parent=0 // pred_check
    _
  $region47: #{_lambda_.1} parent=0 // pred_check_branch
    %734 = sbr.rel (0) target = $region49
  $region48: #{_lambda_.1} parent=0 // pred_region
    _
  $region49: #{_lambda_.1} parent=0 // pred_fallthru
    _
  // Predicated region
  $region50: #{_lambda_.1} parent=0 // pred_check
    _
  $region51: #{_lambda_.1} parent=0 // pred_check_branch
    %736 = sbr.rel (0) target = $region53
  $region52: #{_lambda_.1} parent=0 // pred_region
    _
  $region53: #{_lambda_.1} parent=0 // pred_fallthru
    _
  // Predicated region
  $region54: #{_lambda_.1} parent=0 // pred_check
    _
  $region55: #{_lambda_.1} parent=0 // pred_check_branch
    %738 = sbr.rel (0) target = $region57
  $region56: #{_lambda_.1} parent=0 // pred_region
    _
  $region57: #{_lambda_.1} parent=0 // pred_fallthru
    _
  // Predicated region
  $region58: #{_lambda_.1} parent=0 // pred_check
    _
  $region59: #{_lambda_.1} parent=0 // pred_check_branch
    %740 = sbr.rel (0) target = $region61
  $region60: #{_lambda_.1} parent=0 // pred_region
    _
  $region61: #{_lambda_.1} parent=0 // pred_fallthru
    _
  // Predicated region
  $region62: #{_lambda_.1} parent=0 // pred_check
    _
  $region63: #{_lambda_.1} parent=0 // pred_check_branch
    %742 = sbr.rel (0) target = $region65
  $region64: #{_lambda_.1} parent=0 // pred_region
    _
  $region65: #{_lambda_.1} parent=0 // pred_fallthru
    _

</llo_original>
